<compile_context>
chip_gen: v7x
topology: tpu7x:2x2x1
jax: 0.10.0
libtpu: 0.0.40
codegen_flags: <defaults>
</compile_context>

<pallas_src>
import functools

import jax
import jax.numpy as jnp
from jax.experimental import pallas as pl
from jax.experimental.pallas import tpu as pltpu

LANE = 128          # lane width: pad feature dims to multiples of this
BN_EPS = 1e-5       # torch BatchNorm1d default eps


def _round_up(v, m):
    return ((v + m - 1) // m) * m


# ---------------------------------------------------------------------------
# Fused Pallas kernel: all GCN layers + BN + ReLU + per-graph max-pool + final
# linear, one invocation, everything resident in VMEM.
# ---------------------------------------------------------------------------
def _make_gcnnet_kernel(num_layers, num_graphs, nodes_per_graph):
    def kernel(a_ref, x_ref, w_ref, gamma_ref, beta_ref, wout_ref, bout_ref,
               o_ref):
        a = a_ref[...]                 # [M, M] bf16 block-diag normalized adjacency
        h = x_ref[...]                 # [M, D] f32 padded node features

        for i in range(num_layers):    # unrolled at trace time
            w = w_ref[i]               # [D, D] bf16 (lin.weight^T, zero-padded)
            # GCNConv: x = lin(x) first, then aggregate:  A @ (H @ W)
            hw = jnp.dot(h.astype(jnp.bfloat16), w,
                         preferred_element_type=jnp.float32)
            h = jnp.dot(a, hw.astype(jnp.bfloat16),
                        preferred_element_type=jnp.float32)
            # GCNConv bias intentionally omitted: a per-feature constant is
            # cancelled exactly by the training-mode BN mean subtraction below.
            # TODO(synk): eval-mode BN (running stats) would need the conv bias
            # and running mean/var as extra inputs.

            # BatchNorm1d (training-mode stats over ALL nodes of the batch),
            # fused into one scale/shift; one-pass variance E[x^2]-E[x]^2.
            mean = jnp.mean(h, axis=0, keepdims=True)                # [1, D]
            var = jnp.mean(h * h, axis=0, keepdims=True) - mean * mean
            scale = gamma_ref[i] * jax.lax.rsqrt(var + BN_EPS)       # [1, D]
            shift = beta_ref[i] - mean * scale                       # [1, D]
            # gnn_nonlinear='relu'; gnn_dropout p=0.0 -> identity (omitted)
            h = jnp.maximum(h * scale + shift, 0.0)                  # f32 VPU

        # readout='max' -> global_max_pool per graph (block-diagonal layout:
        # graph b owns rows [b*N, (b+1)*N)).
        g = jnp.max(h.reshape(num_graphs, nodes_per_graph, h.shape[-1]),
                    axis=1)                                          # [B, D]

        # fc_latent_dim=[] -> single final linear, fc_dropout p=0.0 (omitted)
        o_ref[...] = (jnp.dot(g.astype(jnp.bfloat16), wout_ref[...],
                              preferred_element_type=jnp.float32)
                      + bout_ref[...])

    return kernel


@functools.partial(jax.jit, static_argnames=("num_graphs",))
def gcnnet_fused_forward(a_bd, x_pad, w_stack, gamma_stack, beta_stack,
                         w_out, b_out, *, num_graphs):
    """One no-grid pallas_call for the whole forward on a batch of graphs.

    Returns padded logits [num_graphs, OUT_pad]; slice logical dims on host.
    """
    num_layers = w_stack.shape[0]
    total_nodes = a_bd.shape[0]
    assert total_nodes % num_graphs == 0
    nodes_per_graph = total_nodes // num_graphs
    out_pad = w_out.shape[1]

    vmem = pl.BlockSpec(memory_space=pltpu.MemorySpace.VMEM)
    return pl.pallas_call(
        _make_gcnnet_kernel(num_layers, num_graphs, nodes_per_graph),
        out_shape=jax.ShapeDtypeStruct((num_graphs, out_pad), jnp.float32),
        in_specs=[vmem] * 7,
        out_specs=vmem,
    )(a_bd, x_pad, w_stack, gamma_stack, beta_stack, w_out, b_out)


# ---------------------------------------------------------------------------
# Host-side setup (static per graph / per batch, OFF the hot path)
# ---------------------------------------------------------------------------
def build_normalized_adjacency(edge_index, num_nodes, add_self_loops=True):
    """Dense D^{-1/2}(A+I)D^{-1/2}, matching torch_geometric gcn_norm."""
    src, dst = edge_index[0], edge_index[1]
    a = jnp.zeros((num_nodes, num_nodes), jnp.float32).at[dst, src].add(1.0)
    if add_self_loops:
        a = a + jnp.eye(num_nodes, dtype=jnp.float32)
    deg = jnp.sum(a, axis=1)
    dinv = jnp.where(deg > 0, 1.0 / jnp.sqrt(deg), 0.0)
    return dinv[:, None] * a * dinv[None, :]


def build_block_diag_adjacency(per_graph_adjs):
    """PyG-style batching: block-diagonal adjacency over a list of graphs."""
    n = per_graph_adjs[0].shape[0]
    b = len(per_graph_adjs)
    a = jnp.zeros((b * n, b * n), jnp.float32)
    for i, ag in enumerate(per_graph_adjs):
        a = a.at[i * n:(i + 1) * n, i * n:(i + 1) * n].set(ag)
    return a


def init_params(key, input_dim, gnn_latent_dim, output_dim):
    """Packed, pre-transposed, 128-lane-padded parameters.

    w_stack:     [L, Dmax, Dmax]  bf16   (GCNConv lin.weight^T per layer)
    gamma_stack: [L, Dmax]        f32    (BatchNorm weight, torch init = 1)
    beta_stack:  [L, Dmax]        f32    (BatchNorm bias,   torch init = 0)
    w_out:       [Dmax, OUTpad]   bf16   (final nn.Linear weight^T)
    b_out:       [1, OUTpad]      f32
    """
    dims = [input_dim] + list(gnn_latent_dim)
    d_max = max(_round_up(d, LANE) for d in dims)
    num_layers = len(gnn_latent_dim)

    w_stack = jnp.zeros((num_layers, d_max, d_max), jnp.float32)
    gamma_stack = jnp.zeros((num_layers, d_max), jnp.float32)
    beta_stack = jnp.zeros((num_layers, d_max), jnp.float32)
    for i in range(num_layers):
        key, k1 = jax.random.split(key)
        d_in, d_out = dims[i], dims[i + 1]
        w = jax.random.normal(k1, (d_in, d_out), jnp.float32) * 0.1
        w_stack = w_stack.at[i, :d_in, :d_out].set(w)
        gamma_stack = gamma_stack.at[i, :d_out].set(1.0)
        # GCNConv bias not allocated: cancelled by training-mode BN mean sub.

    key, k1, k2 = jax.random.split(key, 3)
    emb_dim = gnn_latent_dim[-1]
    out_pad = _round_up(output_dim, LANE)
    w_mlp = jax.random.normal(k1, (emb_dim, output_dim), jnp.float32) * 0.1
    b_mlp = jax.random.normal(k2, (output_dim,), jnp.float32) * 0.1
    w_out = jnp.zeros((d_max, out_pad), jnp.float32).at[:emb_dim, :output_dim].set(w_mlp)
    b_out = jnp.zeros((1, out_pad), jnp.float32).at[0, :output_dim].set(b_mlp)

    return (w_stack.astype(jnp.bfloat16), gamma_stack, beta_stack,
            w_out.astype(jnp.bfloat16), b_out)


# ---------------------------------------------------------------------------
if __name__ == "__main__":
    key = jax.random.PRNGKey(0)

    N = 16                    # nodes per graph
    B = 8                     # graphs per batch -> 128 total nodes (full MXU rows)
    INPUT_DIM = 8
    GNN_LATENT_DIM = [32, 32]
    OUTPUT_DIM = 4

    # Deterministic topology: B copies of a 16-node undirected ring.
    src = jnp.arange(N, dtype=jnp.int32)
    dst = (src + 1) % N
    edge_index = jnp.stack([jnp.concatenate([src, dst]),
                            jnp.concatenate([dst, src])], axis=0)
    a_single = build_normalized_adjacency(edge_index, N, add_self_loops=True)
    a_bd = build_block_diag_adjacency([a_single] * B).astype(jnp.bfloat16)

    # Parameters (packed stacks), then node features.
    key, kp, kx = jax.random.split(key, 3)
    w_stack, gamma_stack, beta_stack, w_out, b_out = init_params(
        kp, INPUT_DIM, GNN_LATENT_DIM, OUTPUT_DIM)
    d_max = w_stack.shape[1]

    x = jax.random.normal(kx, (B * N, INPUT_DIM), jnp.float32)
    x_pad = jnp.zeros((B * N, d_max), jnp.float32).at[:, :INPUT_DIM].set(x)

    logits_pad = gcnnet_fused_forward(a_bd, x_pad, w_stack, gamma_stack,
                                      beta_stack, w_out, b_out, num_graphs=B)
    logits = logits_pad[:, :OUTPUT_DIM]          # logical slice on host
    jax.block_until_ready(logits)
    assert logits.shape == (B, OUTPUT_DIM)
    print("KERNEL_OK")
</pallas_src>

<mosaic_0001>
module attributes {stable_mosaic.version = 11 : i64} {
  func.func @kernel(%arg0: memref<128x128xbf16, #tpu.memory_space<vmem>>, %arg1: memref<128x128xf32, #tpu.memory_space<vmem>>, %arg2: memref<2x128x128xbf16, #tpu.memory_space<vmem>>, %arg3: memref<2x128xf32, #tpu.memory_space<vmem>>, %arg4: memref<2x128xf32, #tpu.memory_space<vmem>>, %arg5: memref<128x128xbf16, #tpu.memory_space<vmem>>, %arg6: memref<1x128xf32, #tpu.memory_space<vmem>>, %arg7: memref<8x128xf32, #tpu.memory_space<vmem>>) attributes {dimension_semantics = [], scalar_prefetch = 0 : i64, scratch_operands = 0 : i64, tpu.core_type = #tpu.core_type<tc>} {
    %c0 = arith.constant 0 : index
    %c0_0 = arith.constant 0 : index
    %0 = vector.load %arg0[%c0, %c0_0] : memref<128x128xbf16, #tpu.memory_space<vmem>>, vector<128x128xbf16>
    %c0_1 = arith.constant 0 : index
    %c0_2 = arith.constant 0 : index
    %1 = vector.load %arg1[%c0_1, %c0_2] : memref<128x128xf32, #tpu.memory_space<vmem>>, vector<128x128xf32>
    %c0_3 = arith.constant 0 : index
    %c0_4 = arith.constant 0 : index
    %c0_5 = arith.constant 0 : index
    %2 = vector.load %arg2[%c0_3, %c0_4, %c0_5] : memref<2x128x128xbf16, #tpu.memory_space<vmem>>, vector<1x128x128xbf16>
    %3 = vector.shape_cast %2 : vector<1x128x128xbf16> to vector<128x128xbf16>
    %4 = arith.truncf %1 : vector<128x128xf32> to vector<128x128xbf16>
    %cst = arith.constant dense<0.000000e+00> : vector<128x128xf32>
    %5 = tpu.matmul %4, %3, %cst {dimension_numbers = #tpu.dot_dimension_numbers<[1], [0], [0], [1], [0, 0, 1, 1], [], []>} : vector<128x128xbf16>, vector<128x128xbf16>, vector<128x128xf32> -> vector<128x128xf32>
    %6 = arith.truncf %5 : vector<128x128xf32> to vector<128x128xbf16>
    %cst_6 = arith.constant dense<0.000000e+00> : vector<128x128xf32>
    %7 = tpu.matmul %0, %6, %cst_6 {dimension_numbers = #tpu.dot_dimension_numbers<[1], [0], [0], [1], [0, 0, 1, 1], [], []>} : vector<128x128xbf16>, vector<128x128xbf16>, vector<128x128xf32> -> vector<128x128xf32>
    %cst_7 = arith.constant dense<0.000000e+00> : vector<128xf32>
    %8 = vector.multi_reduction <add>, %7, %cst_7 [0] : vector<128x128xf32> to vector<128xf32>
    %9 = vector.shape_cast %8 : vector<128xf32> to vector<1x128xf32>
    %cst_8 = arith.constant 1.280000e+02 : f32
    %10 = vector.broadcast %cst_8 : f32 to vector<1x128xf32>
    %11 = arith.divf %9, %10 : vector<1x128xf32>
    %12 = arith.mulf %7, %7 : vector<128x128xf32>
    %cst_9 = arith.constant dense<0.000000e+00> : vector<128xf32>
    %13 = vector.multi_reduction <add>, %12, %cst_9 [0] : vector<128x128xf32> to vector<128xf32>
    %14 = vector.shape_cast %13 : vector<128xf32> to vector<1x128xf32>
    %cst_10 = arith.constant 1.280000e+02 : f32
    %15 = vector.broadcast %cst_10 : f32 to vector<1x128xf32>
    %16 = arith.divf %14, %15 : vector<1x128xf32>
    %17 = arith.mulf %11, %11 : vector<1x128xf32>
    %18 = arith.subf %16, %17 : vector<1x128xf32>
    %c0_11 = arith.constant 0 : index
    %c0_12 = arith.constant 0 : index
    %19 = vector.load %arg3[%c0_11, %c0_12] : memref<2x128xf32, #tpu.memory_space<vmem>>, vector<1x128xf32>
    %20 = vector.shape_cast %19 : vector<1x128xf32> to vector<128xf32>
    %cst_13 = arith.constant 9.99999974E-6 : f32
    %21 = vector.broadcast %cst_13 : f32 to vector<1x128xf32>
    %22 = arith.addf %18, %21 : vector<1x128xf32>
    %23 = math.rsqrt %22 : vector<1x128xf32>
    %24 = vector.shape_cast %20 : vector<128xf32> to vector<1x128xf32>
    %25 = arith.mulf %24, %23 : vector<1x128xf32>
    %c0_14 = arith.constant 0 : index
    %c0_15 = arith.constant 0 : index
    %26 = vector.load %arg4[%c0_14, %c0_15] : memref<2x128xf32, #tpu.memory_space<vmem>>, vector<1x128xf32>
    %27 = vector.shape_cast %26 : vector<1x128xf32> to vector<128xf32>
    %28 = arith.mulf %11, %25 : vector<1x128xf32>
    %29 = vector.shape_cast %27 : vector<128xf32> to vector<1x128xf32>
    %30 = arith.subf %29, %28 : vector<1x128xf32>
    %31 = vector.broadcast %25 : vector<1x128xf32> to vector<128x128xf32>
    %32 = arith.mulf %7, %31 : vector<128x128xf32>
    %33 = vector.broadcast %30 : vector<1x128xf32> to vector<128x128xf32>
    %34 = arith.addf %32, %33 : vector<128x128xf32>
    %cst_16 = arith.constant 0.000000e+00 : f32
    %35 = vector.broadcast %cst_16 : f32 to vector<128x128xf32>
    %36 = arith.maximumf %34, %35 : vector<128x128xf32>
    %c1 = arith.constant 1 : index
    %c0_17 = arith.constant 0 : index
    %c0_18 = arith.constant 0 : index
    %37 = vector.load %arg2[%c1, %c0_17, %c0_18] : memref<2x128x128xbf16, #tpu.memory_space<vmem>>, vector<1x128x128xbf16>
    %38 = vector.shape_cast %37 : vector<1x128x128xbf16> to vector<128x128xbf16>
    %39 = arith.truncf %36 : vector<128x128xf32> to vector<128x128xbf16>
    %cst_19 = arith.constant dense<0.000000e+00> : vector<128x128xf32>
    %40 = tpu.matmul %39, %38, %cst_19 {dimension_numbers = #tpu.dot_dimension_numbers<[1], [0], [0], [1], [0, 0, 1, 1], [], []>} : vector<128x128xbf16>, vector<128x128xbf16>, vector<128x128xf32> -> vector<128x128xf32>
    %41 = arith.truncf %40 : vector<128x128xf32> to vector<128x128xbf16>
    %cst_20 = arith.constant dense<0.000000e+00> : vector<128x128xf32>
    %42 = tpu.matmul %0, %41, %cst_20 {dimension_numbers = #tpu.dot_dimension_numbers<[1], [0], [0], [1], [0, 0, 1, 1], [], []>} : vector<128x128xbf16>, vector<128x128xbf16>, vector<128x128xf32> -> vector<128x128xf32>
    %cst_21 = arith.constant dense<0.000000e+00> : vector<128xf32>
    %43 = vector.multi_reduction <add>, %42, %cst_21 [0] : vector<128x128xf32> to vector<128xf32>
    %44 = vector.shape_cast %43 : vector<128xf32> to vector<1x128xf32>
    %cst_22 = arith.constant 1.280000e+02 : f32
    %45 = vector.broadcast %cst_22 : f32 to vector<1x128xf32>
    %46 = arith.divf %44, %45 : vector<1x128xf32>
    %47 = arith.mulf %42, %42 : vector<128x128xf32>
    %cst_23 = arith.constant dense<0.000000e+00> : vector<128xf32>
    %48 = vector.multi_reduction <add>, %47, %cst_23 [0] : vector<128x128xf32> to vector<128xf32>
    %49 = vector.shape_cast %48 : vector<128xf32> to vector<1x128xf32>
    %cst_24 = arith.constant 1.280000e+02 : f32
    %50 = vector.broadcast %cst_24 : f32 to vector<1x128xf32>
    %51 = arith.divf %49, %50 : vector<1x128xf32>
    %52 = arith.mulf %46, %46 : vector<1x128xf32>
    %53 = arith.subf %51, %52 : vector<1x128xf32>
    %c1_25 = arith.constant 1 : index
    %c0_26 = arith.constant 0 : index
    %54 = vector.load %arg3[%c1_25, %c0_26] : memref<2x128xf32, #tpu.memory_space<vmem>>, vector<1x128xf32>
    %55 = vector.shape_cast %54 : vector<1x128xf32> to vector<128xf32>
    %cst_27 = arith.constant 9.99999974E-6 : f32
    %56 = vector.broadcast %cst_27 : f32 to vector<1x128xf32>
    %57 = arith.addf %53, %56 : vector<1x128xf32>
    %58 = math.rsqrt %57 : vector<1x128xf32>
    %59 = vector.shape_cast %55 : vector<128xf32> to vector<1x128xf32>
    %60 = arith.mulf %59, %58 : vector<1x128xf32>
    %c1_28 = arith.constant 1 : index
    %c0_29 = arith.constant 0 : index
    %61 = vector.load %arg4[%c1_28, %c0_29] : memref<2x128xf32, #tpu.memory_space<vmem>>, vector<1x128xf32>
    %62 = vector.shape_cast %61 : vector<1x128xf32> to vector<128xf32>
    %63 = arith.mulf %46, %60 : vector<1x128xf32>
    %64 = vector.shape_cast %62 : vector<128xf32> to vector<1x128xf32>
    %65 = arith.subf %64, %63 : vector<1x128xf32>
    %66 = vector.broadcast %60 : vector<1x128xf32> to vector<128x128xf32>
    %67 = arith.mulf %42, %66 : vector<128x128xf32>
    %68 = vector.broadcast %65 : vector<1x128xf32> to vector<128x128xf32>
    %69 = arith.addf %67, %68 : vector<128x128xf32>
    %cst_30 = arith.constant 0.000000e+00 : f32
    %70 = vector.broadcast %cst_30 : f32 to vector<128x128xf32>
    %71 = arith.maximumf %69, %70 : vector<128x128xf32>
    %72 = vector.shape_cast %71 : vector<128x128xf32> to vector<8x16x128xf32>
    %cst_31 = arith.constant dense<0xFF800000> : vector<8x128xf32>
    %73 = vector.multi_reduction <maximumf>, %72, %cst_31 [1] : vector<8x16x128xf32> to vector<8x128xf32>
    %74 = arith.truncf %73 : vector<8x128xf32> to vector<8x128xbf16>
    %c0_32 = arith.constant 0 : index
    %c0_33 = arith.constant 0 : index
    %75 = vector.load %arg5[%c0_32, %c0_33] : memref<128x128xbf16, #tpu.memory_space<vmem>>, vector<128x128xbf16>
    %cst_34 = arith.constant dense<0.000000e+00> : vector<8x128xf32>
    %76 = tpu.matmul %74, %75, %cst_34 {dimension_numbers = #tpu.dot_dimension_numbers<[1], [0], [0], [1], [0, 0, 1, 1], [], []>} : vector<8x128xbf16>, vector<128x128xbf16>, vector<8x128xf32> -> vector<8x128xf32>
    %c0_35 = arith.constant 0 : index
    %c0_36 = arith.constant 0 : index
    %77 = vector.load %arg6[%c0_35, %c0_36] : memref<1x128xf32, #tpu.memory_space<vmem>>, vector<1x128xf32>
    %78 = vector.broadcast %77 : vector<1x128xf32> to vector<8x128xf32>
    %79 = arith.addf %76, %78 : vector<8x128xf32>
    %c0_37 = arith.constant 0 : index
    %c0_38 = arith.constant 0 : index
    %80 = vector.load %arg7[%c0_37, %c0_38] : memref<8x128xf32, #tpu.memory_space<vmem>>, vector<8x128xf32>
    tpu.vector_store %arg7[%c0_37, %c0_38], %79 {strides = array<i32>} : memref<8x128xf32, #tpu.memory_space<vmem>>, vector<8x128xf32>,
    return
  }
}

</mosaic_0001>

<llo_original>
// kernel: gcnnet_fused_forward.1
$region0: #{gcnnet_fused_forward.1}
  #allocation0 [shape = 'u32[]', space=smem, size = 0x4, offset = 0x4, fixed_abs, tag = 'smem constant byte address 0x4 - core index']
  #allocation1 [shape = 'u32[144,128]{1,0:T(1,128)}', space=vmem, size = 0x12000, scoped, tag = 'internal scratch']
  %s0 = inlined_call_operand.hbm [shape: bf16[128,128], index: 0, kind: input, shape index: {}]
  %s1 = inlined_call_operand.hbm [shape: f32[128,128], index: 1, kind: input, shape index: {}]
  %s2 = inlined_call_operand.hbm [shape: bf16[2,128,128], index: 2, kind: input, shape index: {}]
  %s3 = inlined_call_operand.vmem [shape: f32[2,128], index: 3, kind: input, shape index: {}]
  %s4 = inlined_call_operand.vmem [shape: f32[2,128], index: 4, kind: input, shape index: {}]
  %s5 = inlined_call_operand.hbm [shape: bf16[128,128], index: 5, kind: input, shape index: {}]
  %s6 = inlined_call_operand.vmem [shape: f32[1,128], index: 6, kind: input, shape index: {}]
  %s7 = inlined_call_operand.hbm [shape: f32[8,128], index: 7, kind: output, shape index: {}]
  %s8 = sld [smem:[#allocation0]]
  $region54: #{gcnnet_fused_forward.1} parent=0
    _
  %s10 = ssub.s32 1, %s8
  %s11 = scalar_select 0, %s10, %s8
  $region1: #{gcnnet_fused_forward.1} parent=0
    #allocation2 [shape = 'u8[32768]{0}', space=vmem, size = 0x8000, scoped, tag = 'input window, operand 0, single buffered']
    #allocation3 [shape = 's32[1]{0}', space=sflag, size = 0x4, scoped, tag = 'scoped memory for gcnnet_fused_forward.1']
    #allocation4 [shape = 's32[1]{0}', space=sflag, size = 0x4, scoped, tag = 'scoped memory for gcnnet_fused_forward.1']
    #allocation5 [shape = 'u8[65536]{0}', space=vmem, size = 0x10000, scoped, tag = 'input window, operand 1, single buffered']
    #allocation6 [shape = 's32[1]{0}', space=sflag, size = 0x4, scoped, tag = 'scoped memory for gcnnet_fused_forward.1']
    #allocation7 [shape = 'u8[65536]{0}', space=vmem, size = 0x10000, scoped, tag = 'input window, operand 2, single buffered']
    #allocation8 [shape = 'u8[32768]{0}', space=vmem, size = 0x8000, scoped, tag = 'input window, operand 5, single buffered']
    #allocation9 [shape = 's32[1]{0}', space=sflag, size = 0x4, scoped, tag = 'scoped memory for gcnnet_fused_forward.1']
    #allocation10 [shape = 'u8[4096]{0}', space=vmem, size = 0x1000, scoped, tag = 'output window, operand 0, single buffered']
    %12 = vsyncpa [#allocation3], 0
    %13 = vsyncpa [#allocation6], 0
    %14 = vsyncpa [#allocation9], 0
    %15 = vsyncpa [#allocation4], 0
    // Predicated region
    $region2: #{gcnnet_fused_forward.1} parent=1 // pred_check
      _
    $region3: #{gcnnet_fused_forward.1} parent=1 // pred_check_branch
      %17 = sbr.rel (0) target = $region5
    $region4: #{gcnnet_fused_forward.1} parent=1 // pred_region
      %s19 = ssub.s32 1024, 1024
      %20 = vsyncadd [#allocation3], %s19
      %s21 = sshll.u32 [#allocation2], 4
      %s22 = int_to_ptr.vmem [resolvable:$true] %s21
      %27 = dma.hbm_to_vmem [thread:$0]  %s0, 1024, %s22, [#allocation3], 64, 64, 4
    $region5: #{gcnnet_fused_forward.1} parent=1 // pred_fallthru
      _
    // Predicated region
    $region6: #{gcnnet_fused_forward.1} parent=1 // pred_check
      _
    $region7: #{gcnnet_fused_forward.1} parent=1 // pred_check_branch
      %29 = sbr.rel (0) target = $region9
    $region8: #{gcnnet_fused_forward.1} parent=1 // pred_region
      %s31 = ssub.s32 2048, 2048
      %32 = vsyncadd [#allocation6], %s31
      %s33 = sshll.u32 [#allocation5], 4
      %s34 = int_to_ptr.vmem [resolvable:$true] %s33
      %39 = dma.hbm_to_vmem [thread:$0]  %s1, 2048, %s34, [#allocation6], 128, 128, 8
    $region9: #{gcnnet_fused_forward.1} parent=1 // pred_fallthru
      _
    // Predicated region
    $region10: #{gcnnet_fused_forward.1} parent=1 // pred_check
      _
    $region11: #{gcnnet_fused_forward.1} parent=1 // pred_check_branch
      %41 = sbr.rel (0) target = $region13
    $region12: #{gcnnet_fused_forward.1} parent=1 // pred_region
      %s43 = ssub.s32 2048, 2048
      %44 = vsyncadd [#allocation6], %s43
      %s45 = sshll.u32 [#allocation7], 4
      %s46 = int_to_ptr.vmem [resolvable:$true] %s45
      %51 = dma.hbm_to_vmem [thread:$0]  %s2, 2048, %s46, [#allocation6], 64, 64, 4
    $region13: #{gcnnet_fused_forward.1} parent=1 // pred_fallthru
      _
    // Predicated region
    $region14: #{gcnnet_fused_forward.1} parent=1 // pred_check
      _
    $region15: #{gcnnet_fused_forward.1} parent=1 // pred_check_branch
      %53 = sbr.rel (0) target = $region17
    $region16: #{gcnnet_fused_forward.1} parent=1 // pred_region
      _
    $region17: #{gcnnet_fused_forward.1} parent=1 // pred_fallthru
      _
    // Predicated region
    $region18: #{gcnnet_fused_forward.1} parent=1 // pred_check
      _
    $region19: #{gcnnet_fused_forward.1} parent=1 // pred_check_branch
      %55 = sbr.rel (0) target = $region21
    $region20: #{gcnnet_fused_forward.1} parent=1 // pred_region
      _
    $region21: #{gcnnet_fused_forward.1} parent=1 // pred_fallthru
      _
    // Predicated region
    $region22: #{gcnnet_fused_forward.1} parent=1 // pred_check
      _
    $region23: #{gcnnet_fused_forward.1} parent=1 // pred_check_branch
      %57 = sbr.rel (0) target = $region25
    $region24: #{gcnnet_fused_forward.1} parent=1 // pred_region
      %s59 = ssub.s32 1024, 1024
      %60 = vsyncadd [#allocation9], %s59
      %s61 = sshll.u32 [#allocation8], 4
      %s62 = int_to_ptr.vmem [resolvable:$true] %s61
      %67 = dma.hbm_to_vmem [thread:$0]  %s5, 1024, %s62, [#allocation9], 64, 64, 4
    $region25: #{gcnnet_fused_forward.1} parent=1 // pred_fallthru
      _
    // Predicated region
    $region26: #{gcnnet_fused_forward.1} parent=1 // pred_check
      _
    $region27: #{gcnnet_fused_forward.1} parent=1 // pred_check_branch
      %69 = sbr.rel (0) target = $region29
    $region28: #{gcnnet_fused_forward.1} parent=1 // pred_region
      _
    $region29: #{gcnnet_fused_forward.1} parent=1 // pred_fallthru
      _
    // Predicated region
    $region30: #{gcnnet_fused_forward.1} parent=1 // pred_check
      _
    $region31: #{gcnnet_fused_forward.1} parent=1 // pred_check_branch
      %71 = sbr.rel (0) target = $region33
    $region32: #{gcnnet_fused_forward.1} parent=1 // pred_region
      %72 = dma.done [#allocation3], 1024
    $region33: #{gcnnet_fused_forward.1} parent=1 // pred_fallthru
      _
    // Predicated region
    $region34: #{gcnnet_fused_forward.1} parent=1 // pred_check
      _
    $region35: #{gcnnet_fused_forward.1} parent=1 // pred_check_branch
      %74 = sbr.rel (0) target = $region37
    $region36: #{gcnnet_fused_forward.1} parent=1 // pred_region
      %75 = dma.done [#allocation6], 2048
    $region37: #{gcnnet_fused_forward.1} parent=1 // pred_fallthru
      _
    // Predicated region
    $region38: #{gcnnet_fused_forward.1} parent=1 // pred_check
      _
    $region39: #{gcnnet_fused_forward.1} parent=1 // pred_check_branch
      %77 = sbr.rel (0) target = $region41
    $region40: #{gcnnet_fused_forward.1} parent=1 // pred_region
      %78 = dma.done [#allocation6], 2048
    $region41: #{gcnnet_fused_forward.1} parent=1 // pred_fallthru
      _
    // Predicated region
    $region42: #{gcnnet_fused_forward.1} parent=1 // pred_check
      _
    $region43: #{gcnnet_fused_forward.1} parent=1 // pred_check_branch
      %80 = sbr.rel (0) target = $region45
    $region44: #{gcnnet_fused_forward.1} parent=1 // pred_region
      %81 = dma.done [#allocation9], 1024
    $region45: #{gcnnet_fused_forward.1} parent=1 // pred_fallthru
      _
    %v83 = vld [vmem:[#allocation2] sm:$0xf]
    %v84 = vld [vmem:[#allocation2 + $0x4] sm:$0xf]
    %v85 = vld [vmem:[#allocation2 + $0x8] sm:$0xf]
    %v86 = vld [vmem:[#allocation2 + $0xc] sm:$0xf]
    %v87 = vld [vmem:[#allocation2 + $0x10] sm:$0xf]
    %v88 = vld [vmem:[#allocation2 + $0x14] sm:$0xf]
    %v89 = vld [vmem:[#allocation2 + $0x18] sm:$0xf]
    %v90 = vld [vmem:[#allocation2 + $0x1c] sm:$0xf]
    %v91 = vld [vmem:[#allocation2 + $0x20] sm:$0xf]
    %v92 = vld [vmem:[#allocation2 + $0x24] sm:$0xf]
    %v93 = vld [vmem:[#allocation2 + $0x28] sm:$0xf]
    %v94 = vld [vmem:[#allocation2 + $0x2c] sm:$0xf]
    %v95 = vld [vmem:[#allocation2 + $0x30] sm:$0xf]
    %v96 = vld [vmem:[#allocation2 + $0x34] sm:$0xf]
    %v97 = vld [vmem:[#allocation2 + $0x38] sm:$0xf]
    %v98 = vld [vmem:[#allocation2 + $0x3c] sm:$0xf]
    %v99 = vld [vmem:[#allocation5] sm:$0xff]
    %v100 = vld [vmem:[#allocation5 + $0x8] sm:$0xff]
    %v101 = vld [vmem:[#allocation5 + $0x10] sm:$0xff]
    %v102 = vld [vmem:[#allocation5 + $0x18] sm:$0xff]
    %v103 = vld [vmem:[#allocation5 + $0x20] sm:$0xff]
    %v104 = vld [vmem:[#allocation5 + $0x28] sm:$0xff]
    %v105 = vld [vmem:[#allocation5 + $0x30] sm:$0xff]
    %v106 = vld [vmem:[#allocation5 + $0x38] sm:$0xff]
    %v107 = vld [vmem:[#allocation5 + $0x40] sm:$0xff]
    %v108 = vld [vmem:[#allocation5 + $0x48] sm:$0xff]
    %v109 = vld [vmem:[#allocation5 + $0x50] sm:$0xff]
    %v110 = vld [vmem:[#allocation5 + $0x58] sm:$0xff]
    %v111 = vld [vmem:[#allocation5 + $0x60] sm:$0xff]
    %v112 = vld [vmem:[#allocation5 + $0x68] sm:$0xff]
    %v113 = vld [vmem:[#allocation5 + $0x70] sm:$0xff]
    %v114 = vld [vmem:[#allocation5 + $0x78] sm:$0xff]
    %v115 = vld [vmem:[#allocation7] sm:$0xf]
    %v116 = vld [vmem:[#allocation7 + $0x4] sm:$0xf]
    %v117 = vld [vmem:[#allocation7 + $0x8] sm:$0xf]
    %v118 = vld [vmem:[#allocation7 + $0xc] sm:$0xf]
    %v119 = vld [vmem:[#allocation7 + $0x10] sm:$0xf]
    %v120 = vld [vmem:[#allocation7 + $0x14] sm:$0xf]
    %v121 = vld [vmem:[#allocation7 + $0x18] sm:$0xf]
    %v122 = vld [vmem:[#allocation7 + $0x1c] sm:$0xf]
    %v123 = vld [vmem:[#allocation7 + $0x20] sm:$0xf]
    %v124 = vld [vmem:[#allocation7 + $0x24] sm:$0xf]
    %v125 = vld [vmem:[#allocation7 + $0x28] sm:$0xf]
    %v126 = vld [vmem:[#allocation7 + $0x2c] sm:$0xf]
    %v127 = vld [vmem:[#allocation7 + $0x30] sm:$0xf]
    %v128 = vld [vmem:[#allocation7 + $0x34] sm:$0xf]
    %v129 = vld [vmem:[#allocation7 + $0x38] sm:$0xf]
    %v130 = vld [vmem:[#allocation7 + $0x3c] sm:$0xf]
    %v131 = vpack.c.bf16 %v100, %v99
    %v132 = vpack.c.bf16 %v102, %v101
    %v133 = vpack.c.bf16 %v104, %v103
    %v134 = vpack.c.bf16 %v106, %v105
    %v135 = vpack.c.bf16 %v108, %v107
    %v136 = vpack.c.bf16 %v110, %v109
    %v137 = vpack.c.bf16 %v112, %v111
    %v138 = vpack.c.bf16 %v114, %v113
    %v155 = vunpack.c.l.b16 %v115
    %v156 = vunpack.c.l.b16 %v116
    %v157 = vunpack.c.l.b16 %v117
    %v158 = vunpack.c.l.b16 %v118
    %v159 = vunpack.c.l.b16 %v119
    %v160 = vunpack.c.l.b16 %v120
    %v161 = vunpack.c.l.b16 %v121
    %v162 = vunpack.c.l.b16 %v122
    %v163 = vunpack.c.l.b16 %v123
    %v164 = vunpack.c.l.b16 %v124
    %v165 = vunpack.c.l.b16 %v125
    %v166 = vunpack.c.l.b16 %v126
    %v167 = vunpack.c.l.b16 %v127
    %v168 = vunpack.c.l.b16 %v128
    %v169 = vunpack.c.l.b16 %v129
    %v170 = vunpack.c.l.b16 %v130
    %v171 = vpack.c.b16 %v156, %v155
    %v172 = vpack.c.b16 %v158, %v157
    %v173 = vpack.c.b16 %v160, %v159
    %v174 = vpack.c.b16 %v162, %v161
    %v175 = vpack.c.b16 %v164, %v163
    %v176 = vpack.c.b16 %v166, %v165
    %v177 = vpack.c.b16 %v168, %v167
    %v178 = vpack.c.b16 %v170, %v169
    %187 = vmatprep.subr.bf16.mxu0 0
    %188 = vmatpush1.bf16.msra.mxu0 %v171
    %189 = vmatprep.subr.bf16.mxu0 0
    %190 = vmatpush1.bf16.msra.mxu0 %v172
    %191 = vmatprep.subr.bf16.mxu0 0
    %192 = vmatpush1.bf16.msra.mxu0 %v173
    %193 = vmatprep.subr.bf16.mxu0 0
    %194 = vmatpush1.bf16.msra.mxu0 %v174
    %195 = vmatprep.subr.bf16.mxu0 0
    %196 = vmatpush1.bf16.msra.mxu0 %v175
    %197 = vmatprep.subr.bf16.mxu0 0
    %198 = vmatpush1.bf16.msra.mxu0 %v176
    %199 = vmatprep.subr.bf16.mxu0 0
    %200 = vmatpush1.bf16.msra.mxu0 %v177
    %201 = vmatprep.subr.bf16.mxu0 0
    %202 = vmatpush1.bf16.msra.mxu0 %v178
    %203 = vmatprep.subr.bf16.mxu0 0
    %204 = vmatpush1.bf16.msra.mxu0 0
    %205 = vmatprep.subr.bf16.mxu0 0
    %206 = vmatpush1.bf16.msra.mxu0 0
    %207 = vmatprep.subr.bf16.mxu0 0
    %208 = vmatpush1.bf16.msra.mxu0 0
    %209 = vmatprep.subr.bf16.mxu0 0
    %210 = vmatpush1.bf16.msra.mxu0 0
    %211 = vmatprep.subr.bf16.mxu0 0
    %212 = vmatpush1.bf16.msra.mxu0 0
    %213 = vmatprep.subr.bf16.mxu0 0
    %214 = vmatpush1.bf16.msra.mxu0 0
    %215 = vmatprep.subr.bf16.mxu0 0
    %216 = vmatpush1.bf16.msra.mxu0 0
    %217 = vmatprep.subr.bf16.mxu0 0
    %218 = vmatpush1.bf16.msra.mxu0 0
    %219 = vmatprep.mubr.bf16.mxu0 0
    %220 = vmatmul.mubr.bf16.gmra.mrb[0].mxu0 %v131
    %v221 = vpop.f32.mrb[0].mxu0
    %v222 = vadd.f32 0.0, %v221
    %v223 = vpop.f32.mrb[0].mxu0
    %v224 = vpop.f32.mrb[0].mxu0
    %v225 = vadd.f32 0.0, %v224
    %v226 = vpop.f32.mrb[0].mxu0
    %227 = vmatprep.mubr.bf16.mxu0 0
    %228 = vmatmul.mubr.bf16.gmra.mrb[0].mxu0 %v132
    %v229 = vpop.f32.mrb[0].mxu0
    %v230 = vadd.f32 0.0, %v229
    %v231 = vpop.f32.mrb[0].mxu0
    %v232 = vpop.f32.mrb[0].mxu0
    %v233 = vadd.f32 0.0, %v232
    %v234 = vpop.f32.mrb[0].mxu0
    %235 = vmatprep.mubr.bf16.mxu0 0
    %236 = vmatmul.mubr.bf16.gmra.mrb[0].mxu0 %v133
    %v237 = vpop.f32.mrb[0].mxu0
    %v238 = vadd.f32 0.0, %v237
    %v239 = vpop.f32.mrb[0].mxu0
    %v240 = vpop.f32.mrb[0].mxu0
    %v241 = vadd.f32 0.0, %v240
    %v242 = vpop.f32.mrb[0].mxu0
    %243 = vmatprep.mubr.bf16.mxu0 0
    %244 = vmatmul.mubr.bf16.gmra.mrb[0].mxu0 %v134
    %v245 = vpop.f32.mrb[0].mxu0
    %v246 = vadd.f32 0.0, %v245
    %v247 = vpop.f32.mrb[0].mxu0
    %v248 = vpop.f32.mrb[0].mxu0
    %v249 = vadd.f32 0.0, %v248
    %v250 = vpop.f32.mrb[0].mxu0
    %251 = vmatprep.mubr.bf16.mxu0 0
    %252 = vmatmul.mubr.bf16.gmra.mrb[0].mxu0 %v135
    %v253 = vpop.f32.mrb[0].mxu0
    %v254 = vadd.f32 0.0, %v253
    %v255 = vpop.f32.mrb[0].mxu0
    %v256 = vpop.f32.mrb[0].mxu0
    %v257 = vadd.f32 0.0, %v256
    %v258 = vpop.f32.mrb[0].mxu0
    %259 = vmatprep.mubr.bf16.mxu0 0
    %260 = vmatmul.mubr.bf16.gmra.mrb[0].mxu0 %v136
    %v261 = vpop.f32.mrb[0].mxu0
    %v262 = vadd.f32 0.0, %v261
    %v263 = vpop.f32.mrb[0].mxu0
    %v264 = vpop.f32.mrb[0].mxu0
    %v265 = vadd.f32 0.0, %v264
    %v266 = vpop.f32.mrb[0].mxu0
    %267 = vmatprep.mubr.bf16.mxu0 0
    %268 = vmatmul.mubr.bf16.gmra.mrb[0].mxu0 %v137
    %v269 = vpop.f32.mrb[0].mxu0
    %v270 = vadd.f32 0.0, %v269
    %v271 = vpop.f32.mrb[0].mxu0
    %v272 = vpop.f32.mrb[0].mxu0
    %v273 = vadd.f32 0.0, %v272
    %v274 = vpop.f32.mrb[0].mxu0
    %275 = vmatprep.mubr.bf16.mxu0 0
    %276 = vmatmul.mubr.bf16.gmra.mrb[0].mxu0 %v138
    %v277 = vpop.f32.mrb[0].mxu0
    %v278 = vadd.f32 0.0, %v277
    %v279 = vpop.f32.mrb[0].mxu0
    %v280 = vpop.f32.mrb[0].mxu0
    %v281 = vadd.f32 0.0, %v280
    %v282 = vpop.f32.mrb[0].mxu0
    %283 = vdwg.mxu0
    %v284 = vpack.c.bf16 %v225, %v222
    %v285 = vpack.c.bf16 %v233, %v230
    %v286 = vpack.c.bf16 %v241, %v238
    %v287 = vpack.c.bf16 %v249, %v246
    %v288 = vpack.c.bf16 %v257, %v254
    %v289 = vpack.c.bf16 %v265, %v262
    %v290 = vpack.c.bf16 %v273, %v270
    %v291 = vpack.c.bf16 %v281, %v278
    %v308 = vunpack.c.l.b16 %v83
    %v309 = vunpack.c.l.b16 %v84
    %v310 = vunpack.c.l.b16 %v85
    %v311 = vunpack.c.l.b16 %v86
    %v312 = vunpack.c.l.b16 %v87
    %v313 = vunpack.c.l.b16 %v88
    %v314 = vunpack.c.l.b16 %v89
    %v315 = vunpack.c.l.b16 %v90
    %v316 = vunpack.c.l.b16 %v91
    %v317 = vunpack.c.l.b16 %v92
    %v318 = vunpack.c.l.b16 %v93
    %v319 = vunpack.c.l.b16 %v94
    %v320 = vunpack.c.l.b16 %v95
    %v321 = vunpack.c.l.b16 %v96
    %v322 = vunpack.c.l.b16 %v97
    %v323 = vunpack.c.l.b16 %v98
    %v324 = vpack.c.b16 %v309, %v308
    %v325 = vpack.c.b16 %v311, %v310
    %v326 = vpack.c.b16 %v313, %v312
    %v327 = vpack.c.b16 %v315, %v314
    %v328 = vpack.c.b16 %v317, %v316
    %v329 = vpack.c.b16 %v319, %v318
    %v330 = vpack.c.b16 %v321, %v320
    %v331 = vpack.c.b16 %v323, %v322
    %340 = vmatprep.subr.bf16.mxu0 0
    %341 = vmatpush1.bf16.msra.mxu0 %v284
    %342 = vmatprep.subr.bf16.mxu0 0
    %343 = vmatpush1.bf16.msra.mxu0 %v285
    %344 = vmatprep.subr.bf16.mxu0 0
    %345 = vmatpush1.bf16.msra.mxu0 %v286
    %346 = vmatprep.subr.bf16.mxu0 0
    %347 = vmatpush1.bf16.msra.mxu0 %v287
    %348 = vmatprep.subr.bf16.mxu0 0
    %349 = vmatpush1.bf16.msra.mxu0 %v288
    %350 = vmatprep.subr.bf16.mxu0 0
    %351 = vmatpush1.bf16.msra.mxu0 %v289
    %352 = vmatprep.subr.bf16.mxu0 0
    %353 = vmatpush1.bf16.msra.mxu0 %v290
    %354 = vmatprep.subr.bf16.mxu0 0
    %355 = vmatpush1.bf16.msra.mxu0 %v291
    %356 = vmatprep.subr.bf16.mxu0 0
    %357 = vmatpush1.bf16.msra.mxu0 0
    %358 = vmatprep.subr.bf16.mxu0 0
    %359 = vmatpush1.bf16.msra.mxu0 0
    %360 = vmatprep.subr.bf16.mxu0 0
    %361 = vmatpush1.bf16.msra.mxu0 0
    %362 = vmatprep.subr.bf16.mxu0 0
    %363 = vmatpush1.bf16.msra.mxu0 0
    %364 = vmatprep.subr.bf16.mxu0 0
    %365 = vmatpush1.bf16.msra.mxu0 0
    %366 = vmatprep.subr.bf16.mxu0 0
    %367 = vmatpush1.bf16.msra.mxu0 0
    %368 = vmatprep.subr.bf16.mxu0 0
    %369 = vmatpush1.bf16.msra.mxu0 0
    %370 = vmatprep.subr.bf16.mxu0 0
    %371 = vmatpush1.bf16.msra.mxu0 0
    %372 = vmatprep.mubr.bf16.mxu0 0
    %373 = vmatmul.mubr.bf16.gmra.mrb[0].mxu0 %v324
    %v374 = vpop.f32.mrb[0].mxu0
    %v375 = vadd.f32 0.0, %v374
    %v376 = vpop.f32.mrb[0].mxu0
    %v377 = vpop.f32.mrb[0].mxu0
    %v378 = vadd.f32 0.0, %v377
    %v379 = vpop.f32.mrb[0].mxu0
    %380 = vmatprep.mubr.bf16.mxu0 0
    %381 = vmatmul.mubr.bf16.gmra.mrb[0].mxu0 %v325
    %v382 = vpop.f32.mrb[0].mxu0
    %v383 = vadd.f32 0.0, %v382
    %v384 = vpop.f32.mrb[0].mxu0
    %v385 = vpop.f32.mrb[0].mxu0
    %v386 = vadd.f32 0.0, %v385
    %v387 = vpop.f32.mrb[0].mxu0
    %388 = vmatprep.mubr.bf16.mxu0 0
    %389 = vmatmul.mubr.bf16.gmra.mrb[0].mxu0 %v326
    %v390 = vpop.f32.mrb[0].mxu0
    %v391 = vadd.f32 0.0, %v390
    %v392 = vpop.f32.mrb[0].mxu0
    %v393 = vpop.f32.mrb[0].mxu0
    %v394 = vadd.f32 0.0, %v393
    %v395 = vpop.f32.mrb[0].mxu0
    %396 = vmatprep.mubr.bf16.mxu0 0
    %397 = vmatmul.mubr.bf16.gmra.mrb[0].mxu0 %v327
    %v398 = vpop.f32.mrb[0].mxu0
    %v399 = vadd.f32 0.0, %v398
    %v400 = vpop.f32.mrb[0].mxu0
    %v401 = vpop.f32.mrb[0].mxu0
    %v402 = vadd.f32 0.0, %v401
    %v403 = vpop.f32.mrb[0].mxu0
    %404 = vmatprep.mubr.bf16.mxu0 0
    %405 = vmatmul.mubr.bf16.gmra.mrb[0].mxu0 %v328
    %v406 = vpop.f32.mrb[0].mxu0
    %v407 = vadd.f32 0.0, %v406
    %v408 = vpop.f32.mrb[0].mxu0
    %v409 = vpop.f32.mrb[0].mxu0
    %v410 = vadd.f32 0.0, %v409
    %v411 = vpop.f32.mrb[0].mxu0
    %412 = vmatprep.mubr.bf16.mxu0 0
    %413 = vmatmul.mubr.bf16.gmra.mrb[0].mxu0 %v329
    %v414 = vpop.f32.mrb[0].mxu0
    %v415 = vadd.f32 0.0, %v414
    %v416 = vpop.f32.mrb[0].mxu0
    %v417 = vpop.f32.mrb[0].mxu0
    %v418 = vadd.f32 0.0, %v417
    %v419 = vpop.f32.mrb[0].mxu0
    %420 = vmatprep.mubr.bf16.mxu0 0
    %421 = vmatmul.mubr.bf16.gmra.mrb[0].mxu0 %v330
    %v422 = vpop.f32.mrb[0].mxu0
    %v423 = vadd.f32 0.0, %v422
    %v424 = vpop.f32.mrb[0].mxu0
    %v425 = vpop.f32.mrb[0].mxu0
    %v426 = vadd.f32 0.0, %v425
    %v427 = vpop.f32.mrb[0].mxu0
    %428 = vmatprep.mubr.bf16.mxu0 0
    %429 = vmatmul.mubr.bf16.gmra.mrb[0].mxu0 %v331
    %v430 = vpop.f32.mrb[0].mxu0
    %v431 = vadd.f32 0.0, %v430
    %v432 = vpop.f32.mrb[0].mxu0
    %v433 = vpop.f32.mrb[0].mxu0
    %v434 = vadd.f32 0.0, %v433
    %v435 = vpop.f32.mrb[0].mxu0
    %436 = vdwg.mxu0
    %v437 = vadd.f32 %v375, %v378
    %v438 = vadd.f32 %v437, %v383
    %v439 = vadd.f32 %v438, %v386
    %v440 = vadd.f32 %v439, %v391
    %v441 = vadd.f32 %v440, %v394
    %v442 = vadd.f32 %v441, %v399
    %v443 = vadd.f32 %v442, %v402
    %v444 = vadd.f32 %v443, %v407
    %v445 = vadd.f32 %v444, %v410
    %v446 = vadd.f32 %v445, %v415
    %v447 = vadd.f32 %v446, %v418
    %v448 = vadd.f32 %v447, %v423
    %v449 = vadd.f32 %v448, %v426
    %v450 = vadd.f32 %v449, %v431
    %v451 = vadd.f32 %v450, %v434
    %v452 = vrot.slane %v451, 4
    %v453 = vadd.f32 %v451, %v452
    %v454 = vrot.slane %v453, 2
    %v455 = vadd.f32 %v453, %v454
    %v456 = vrot.slane %v455, 1
    %v457 = vadd.f32 %v455, %v456
    %v458 = vrcp.pop 128.0
    %v459 = vmul.f32 %v457, %v458
    %v460 = vmul.f32 %v375, %v375
    %v461 = vmul.f32 %v378, %v378
    %v462 = vmul.f32 %v383, %v383
    %v463 = vmul.f32 %v386, %v386
    %v464 = vmul.f32 %v391, %v391
    %v465 = vmul.f32 %v394, %v394
    %v466 = vmul.f32 %v399, %v399
    %v467 = vmul.f32 %v402, %v402
    %v468 = vmul.f32 %v407, %v407
    %v469 = vmul.f32 %v410, %v410
    %v470 = vmul.f32 %v415, %v415
    %v471 = vmul.f32 %v418, %v418
    %v472 = vmul.f32 %v423, %v423
    %v473 = vmul.f32 %v426, %v426
    %v474 = vmul.f32 %v431, %v431
    %v475 = vmul.f32 %v434, %v434
    %v476 = vadd.f32 %v460, %v461
    %v477 = vadd.f32 %v476, %v462
    %v478 = vadd.f32 %v477, %v463
    %v479 = vadd.f32 %v478, %v464
    %v480 = vadd.f32 %v479, %v465
    %v481 = vadd.f32 %v480, %v466
    %v482 = vadd.f32 %v481, %v467
    %v483 = vadd.f32 %v482, %v468
    %v484 = vadd.f32 %v483, %v469
    %v485 = vadd.f32 %v484, %v470
    %v486 = vadd.f32 %v485, %v471
    %v487 = vadd.f32 %v486, %v472
    %v488 = vadd.f32 %v487, %v473
    %v489 = vadd.f32 %v488, %v474
    %v490 = vadd.f32 %v489, %v475
    %v491 = vrot.slane %v490, 4
    %v492 = vadd.f32 %v490, %v491
    %v493 = vrot.slane %v492, 2
    %v494 = vadd.f32 %v492, %v493
    %v495 = vrot.slane %v494, 1
    %v496 = vadd.f32 %v494, %v495
    %v497 = vmul.f32 %v496, %v458
    %v498 = vmul.f32 %v459, %v459
    %v499 = vsub.f32 %v497, %v498
    %v500 = vld [vmem:[%s3] sm:$0x1]
    %v501 = vadd.f32 %v499, 1e-05
    %v502 = vrsqrt.pop %v501
    %v503 = vmul.f32 %v500, %v502
    %v504 = vld [vmem:[%s4] sm:$0x1]
    %v505 = vmul.f32 %v459, %v503
    %v506 = vsub.f32 %v504, %v505
    %v507 = vlaneseq
    %v508 = vshrl.u32 %v507, 7
    %v509 = vsub.s32 0, %v508
    %v510 = vrot.slane %v503, %v509
    %v511 = vmul.f32 %v375, %v510
    %v512 = vmul.f32 %v378, %v510
    %v513 = vmul.f32 %v383, %v510
    %v514 = vmul.f32 %v386, %v510
    %v515 = vmul.f32 %v391, %v510
    %v516 = vmul.f32 %v394, %v510
    %v517 = vmul.f32 %v399, %v510
    %v518 = vmul.f32 %v402, %v510
    %v519 = vmul.f32 %v407, %v510
    %v520 = vmul.f32 %v410, %v510
    %v521 = vmul.f32 %v415, %v510
    %v522 = vmul.f32 %v418, %v510
    %v523 = vmul.f32 %v423, %v510
    %v524 = vmul.f32 %v426, %v510
    %v525 = vmul.f32 %v431, %v510
    %v526 = vmul.f32 %v434, %v510
    %v527 = vlaneseq
    %v528 = vshrl.u32 %v527, 7
    %v529 = vsub.s32 0, %v528
    %v530 = vrot.slane %v506, %v529
    %v531 = vadd.f32 %v511, %v530
    %v532 = vadd.f32 %v512, %v530
    %v533 = vadd.f32 %v513, %v530
    %v534 = vadd.f32 %v514, %v530
    %v535 = vadd.f32 %v515, %v530
    %v536 = vadd.f32 %v516, %v530
    %v537 = vadd.f32 %v517, %v530
    %v538 = vadd.f32 %v518, %v530
    %v539 = vadd.f32 %v519, %v530
    %v540 = vadd.f32 %v520, %v530
    %v541 = vadd.f32 %v521, %v530
    %v542 = vadd.f32 %v522, %v530
    %v543 = vadd.f32 %v523, %v530
    %v544 = vadd.f32 %v524, %v530
    %v545 = vadd.f32 %v525, %v530
    %v546 = vadd.f32 %v526, %v530
    %v547 = vmax.f32 %v531, 0.0
    %v548 = vmax.f32 %v532, 0.0
    %v549 = vmax.f32 %v533, 0.0
    %v550 = vmax.f32 %v534, 0.0
    %v551 = vmax.f32 %v535, 0.0
    %v552 = vmax.f32 %v536, 0.0
    %v553 = vmax.f32 %v537, 0.0
    %v554 = vmax.f32 %v538, 0.0
    %v555 = vmax.f32 %v539, 0.0
    %v556 = vmax.f32 %v540, 0.0
    %v557 = vmax.f32 %v541, 0.0
    %v558 = vmax.f32 %v542, 0.0
    %v559 = vmax.f32 %v543, 0.0
    %v560 = vmax.f32 %v544, 0.0
    %v561 = vmax.f32 %v545, 0.0
    %v562 = vmax.f32 %v546, 0.0
    %s563 = scalar_lea.vmem [#allocation7], 64
    %v564 = vld [vmem:[%s563] sm:$0xf]
    %v565 = vld [vmem:[%s563 + $0x4] sm:$0xf]
    %v566 = vld [vmem:[%s563 + $0x8] sm:$0xf]
    %v567 = vld [vmem:[%s563 + $0xc] sm:$0xf]
    %v568 = vld [vmem:[%s563 + $0x10] sm:$0xf]
    %v569 = vld [vmem:[%s563 + $0x14] sm:$0xf]
    %v570 = vld [vmem:[%s563 + $0x18] sm:$0xf]
    %v571 = vld [vmem:[%s563 + $0x1c] sm:$0xf]
    %v572 = vld [vmem:[%s563 + $0x20] sm:$0xf]
    %v573 = vld [vmem:[%s563 + $0x24] sm:$0xf]
    %v574 = vld [vmem:[%s563 + $0x28] sm:$0xf]
    %v575 = vld [vmem:[%s563 + $0x2c] sm:$0xf]
    %v576 = vld [vmem:[%s563 + $0x30] sm:$0xf]
    %v577 = vld [vmem:[%s563 + $0x34] sm:$0xf]
    %v578 = vld [vmem:[%s563 + $0x38] sm:$0xf]
    %v579 = vld [vmem:[%s563 + $0x3c] sm:$0xf]
    %v580 = vpack.c.bf16 %v548, %v547
    %v581 = vpack.c.bf16 %v550, %v549
    %v582 = vpack.c.bf16 %v552, %v551
    %v583 = vpack.c.bf16 %v554, %v553
    %v584 = vpack.c.bf16 %v556, %v555
    %v585 = vpack.c.bf16 %v558, %v557
    %v586 = vpack.c.bf16 %v560, %v559
    %v587 = vpack.c.bf16 %v562, %v561
    %v604 = vunpack.c.l.b16 %v564
    %v605 = vunpack.c.l.b16 %v565
    %v606 = vunpack.c.l.b16 %v566
    %v607 = vunpack.c.l.b16 %v567
    %v608 = vunpack.c.l.b16 %v568
    %v609 = vunpack.c.l.b16 %v569
    %v610 = vunpack.c.l.b16 %v570
    %v611 = vunpack.c.l.b16 %v571
    %v612 = vunpack.c.l.b16 %v572
    %v613 = vunpack.c.l.b16 %v573
    %v614 = vunpack.c.l.b16 %v574
    %v615 = vunpack.c.l.b16 %v575
    %v616 = vunpack.c.l.b16 %v576
    %v617 = vunpack.c.l.b16 %v577
    %v618 = vunpack.c.l.b16 %v578
    %v619 = vunpack.c.l.b16 %v579
    %v620 = vpack.c.b16 %v605, %v604
    %v621 = vpack.c.b16 %v607, %v606
    %v622 = vpack.c.b16 %v609, %v608
    %v623 = vpack.c.b16 %v611, %v610
    %v624 = vpack.c.b16 %v613, %v612
    %v625 = vpack.c.b16 %v615, %v614
    %v626 = vpack.c.b16 %v617, %v616
    %v627 = vpack.c.b16 %v619, %v618
    %636 = vmatprep.subr.bf16.mxu0 0
    %637 = vmatpush1.bf16.msra.mxu0 %v620
    %638 = vmatprep.subr.bf16.mxu0 0
    %639 = vmatpush1.bf16.msra.mxu0 %v621
    %640 = vmatprep.subr.bf16.mxu0 0
    %641 = vmatpush1.bf16.msra.mxu0 %v622
    %642 = vmatprep.subr.bf16.mxu0 0
    %643 = vmatpush1.bf16.msra.mxu0 %v623
    %644 = vmatprep.subr.bf16.mxu0 0
    %645 = vmatpush1.bf16.msra.mxu0 %v624
    %646 = vmatprep.subr.bf16.mxu0 0
    %647 = vmatpush1.bf16.msra.mxu0 %v625
    %648 = vmatprep.subr.bf16.mxu0 0
    %649 = vmatpush1.bf16.msra.mxu0 %v626
    %650 = vmatprep.subr.bf16.mxu0 0
    %651 = vmatpush1.bf16.msra.mxu0 %v627
    %652 = vmatprep.subr.bf16.mxu0 0
    %653 = vmatpush1.bf16.msra.mxu0 0
    %654 = vmatprep.subr.bf16.mxu0 0
    %655 = vmatpush1.bf16.msra.mxu0 0
    %656 = vmatprep.subr.bf16.mxu0 0
    %657 = vmatpush1.bf16.msra.mxu0 0
    %658 = vmatprep.subr.bf16.mxu0 0
    %659 = vmatpush1.bf16.msra.mxu0 0
    %660 = vmatprep.subr.bf16.mxu0 0
    %661 = vmatpush1.bf16.msra.mxu0 0
    %662 = vmatprep.subr.bf16.mxu0 0
    %663 = vmatpush1.bf16.msra.mxu0 0
    %664 = vmatprep.subr.bf16.mxu0 0
    %665 = vmatpush1.bf16.msra.mxu0 0
    %666 = vmatprep.subr.bf16.mxu0 0
    %667 = vmatpush1.bf16.msra.mxu0 0
    %668 = vmatprep.mubr.bf16.mxu0 0
    %669 = vmatmul.mubr.bf16.gmra.mrb[0].mxu0 %v580
    %v670 = vpop.f32.mrb[0].mxu0
    %v671 = vadd.f32 0.0, %v670
    %v672 = vpop.f32.mrb[0].mxu0
    %v673 = vpop.f32.mrb[0].mxu0
    %v674 = vadd.f32 0.0, %v673
    %v675 = vpop.f32.mrb[0].mxu0
    %676 = vmatprep.mubr.bf16.mxu0 0
    %677 = vmatmul.mubr.bf16.gmra.mrb[0].mxu0 %v581
    %v678 = vpop.f32.mrb[0].mxu0
    %v679 = vadd.f32 0.0, %v678
    %v680 = vpop.f32.mrb[0].mxu0
    %v681 = vpop.f32.mrb[0].mxu0
    %v682 = vadd.f32 0.0, %v681
    %v683 = vpop.f32.mrb[0].mxu0
    %684 = vmatprep.mubr.bf16.mxu0 0
    %685 = vmatmul.mubr.bf16.gmra.mrb[0].mxu0 %v582
    %v686 = vpop.f32.mrb[0].mxu0
    %v687 = vadd.f32 0.0, %v686
    %v688 = vpop.f32.mrb[0].mxu0
    %v689 = vpop.f32.mrb[0].mxu0
    %v690 = vadd.f32 0.0, %v689
    %v691 = vpop.f32.mrb[0].mxu0
    %692 = vmatprep.mubr.bf16.mxu0 0
    %693 = vmatmul.mubr.bf16.gmra.mrb[0].mxu0 %v583
    %v694 = vpop.f32.mrb[0].mxu0
    %v695 = vadd.f32 0.0, %v694
    %v696 = vpop.f32.mrb[0].mxu0
    %v697 = vpop.f32.mrb[0].mxu0
    %v698 = vadd.f32 0.0, %v697
    %v699 = vpop.f32.mrb[0].mxu0
    %700 = vmatprep.mubr.bf16.mxu0 0
    %701 = vmatmul.mubr.bf16.gmra.mrb[0].mxu0 %v584
    %v702 = vpop.f32.mrb[0].mxu0
    %v703 = vadd.f32 0.0, %v702
    %v704 = vpop.f32.mrb[0].mxu0
    %v705 = vpop.f32.mrb[0].mxu0
    %v706 = vadd.f32 0.0, %v705
    %v707 = vpop.f32.mrb[0].mxu0
    %708 = vmatprep.mubr.bf16.mxu0 0
    %709 = vmatmul.mubr.bf16.gmra.mrb[0].mxu0 %v585
    %v710 = vpop.f32.mrb[0].mxu0
    %v711 = vadd.f32 0.0, %v710
    %v712 = vpop.f32.mrb[0].mxu0
    %v713 = vpop.f32.mrb[0].mxu0
    %v714 = vadd.f32 0.0, %v713
    %v715 = vpop.f32.mrb[0].mxu0
    %716 = vmatprep.mubr.bf16.mxu0 0
    %717 = vmatmul.mubr.bf16.gmra.mrb[0].mxu0 %v586
    %v718 = vpop.f32.mrb[0].mxu0
    %v719 = vadd.f32 0.0, %v718
    %v720 = vpop.f32.mrb[0].mxu0
    %v721 = vpop.f32.mrb[0].mxu0
    %v722 = vadd.f32 0.0, %v721
    %v723 = vpop.f32.mrb[0].mxu0
    %724 = vmatprep.mubr.bf16.mxu0 0
    %725 = vmatmul.mubr.bf16.gmra.mrb[0].mxu0 %v587
    %v726 = vpop.f32.mrb[0].mxu0
    %v727 = vadd.f32 0.0, %v726
    %v728 = vpop.f32.mrb[0].mxu0
    %v729 = vpop.f32.mrb[0].mxu0
    %v730 = vadd.f32 0.0, %v729
    %v731 = vpop.f32.mrb[0].mxu0
    %732 = vdwg.mxu0
    %v733 = vpack.c.bf16 %v674, %v671
    %v734 = vpack.c.bf16 %v682, %v679
    %v735 = vpack.c.bf16 %v690, %v687
    %v736 = vpack.c.bf16 %v698, %v695
    %v737 = vpack.c.bf16 %v706, %v703
    %v738 = vpack.c.bf16 %v714, %v711
    %v739 = vpack.c.bf16 %v722, %v719
    %v740 = vpack.c.bf16 %v730, %v727
    %741 = vmatprep.subr.bf16.mxu0 0
    %742 = vmatpush1.bf16.msra.mxu0 %v733
    %743 = vmatprep.subr.bf16.mxu0 0
    %744 = vmatpush1.bf16.msra.mxu0 %v734
    %745 = vmatprep.subr.bf16.mxu0 0
    %746 = vmatpush1.bf16.msra.mxu0 %v735
    %747 = vmatprep.subr.bf16.mxu0 0
    %748 = vmatpush1.bf16.msra.mxu0 %v736
    %749 = vmatprep.subr.bf16.mxu0 0
    %750 = vmatpush1.bf16.msra.mxu0 %v737
    %751 = vmatprep.subr.bf16.mxu0 0
    %752 = vmatpush1.bf16.msra.mxu0 %v738
    %753 = vmatprep.subr.bf16.mxu0 0
    %754 = vmatpush1.bf16.msra.mxu0 %v739
    %755 = vmatprep.subr.bf16.mxu0 0
    %756 = vmatpush1.bf16.msra.mxu0 %v740
    %757 = vmatprep.subr.bf16.mxu0 0
    %758 = vmatpush1.bf16.msra.mxu0 0
    %759 = vmatprep.subr.bf16.mxu0 0
    %760 = vmatpush1.bf16.msra.mxu0 0
    %761 = vmatprep.subr.bf16.mxu0 0
    %762 = vmatpush1.bf16.msra.mxu0 0
    %763 = vmatprep.subr.bf16.mxu0 0
    %764 = vmatpush1.bf16.msra.mxu0 0
    %765 = vmatprep.subr.bf16.mxu0 0
    %766 = vmatpush1.bf16.msra.mxu0 0
    %767 = vmatprep.subr.bf16.mxu0 0
    %768 = vmatpush1.bf16.msra.mxu0 0
    %769 = vmatprep.subr.bf16.mxu0 0
    %770 = vmatpush1.bf16.msra.mxu0 0
    %771 = vmatprep.subr.bf16.mxu0 0
    %772 = vmatpush1.bf16.msra.mxu0 0
    %773 = vmatprep.mubr.bf16.mxu0 0
    %774 = vmatmul.mubr.bf16.gmra.mrb[0].mxu0 %v324
    %v775 = vpop.f32.mrb[0].mxu0
    %v776 = vadd.f32 0.0, %v775
    %v777 = vpop.f32.mrb[0].mxu0
    %v778 = vpop.f32.mrb[0].mxu0
    %v779 = vadd.f32 0.0, %v778
    %v780 = vpop.f32.mrb[0].mxu0
    %781 = vmatprep.mubr.bf16.mxu0 0
    %782 = vmatmul.mubr.bf16.gmra.mrb[0].mxu0 %v325
    %v783 = vpop.f32.mrb[0].mxu0
    %v784 = vadd.f32 0.0, %v783
    %v785 = vpop.f32.mrb[0].mxu0
    %v786 = vpop.f32.mrb[0].mxu0
    %v787 = vadd.f32 0.0, %v786
    %v788 = vpop.f32.mrb[0].mxu0
    %789 = vmatprep.mubr.bf16.mxu0 0
    %790 = vmatmul.mubr.bf16.gmra.mrb[0].mxu0 %v326
    %v791 = vpop.f32.mrb[0].mxu0
    %v792 = vadd.f32 0.0, %v791
    %v793 = vpop.f32.mrb[0].mxu0
    %v794 = vpop.f32.mrb[0].mxu0
    %v795 = vadd.f32 0.0, %v794
    %v796 = vpop.f32.mrb[0].mxu0
    %797 = vmatprep.mubr.bf16.mxu0 0
    %798 = vmatmul.mubr.bf16.gmra.mrb[0].mxu0 %v327
    %v799 = vpop.f32.mrb[0].mxu0
    %v800 = vadd.f32 0.0, %v799
    %v801 = vpop.f32.mrb[0].mxu0
    %v802 = vpop.f32.mrb[0].mxu0
    %v803 = vadd.f32 0.0, %v802
    %v804 = vpop.f32.mrb[0].mxu0
    %805 = vmatprep.mubr.bf16.mxu0 0
    %806 = vmatmul.mubr.bf16.gmra.mrb[0].mxu0 %v328
    %v807 = vpop.f32.mrb[0].mxu0
    %v808 = vadd.f32 0.0, %v807
    %v809 = vpop.f32.mrb[0].mxu0
    %v810 = vpop.f32.mrb[0].mxu0
    %v811 = vadd.f32 0.0, %v810
    %v812 = vpop.f32.mrb[0].mxu0
    %813 = vmatprep.mubr.bf16.mxu0 0
    %814 = vmatmul.mubr.bf16.gmra.mrb[0].mxu0 %v329
    %v815 = vpop.f32.mrb[0].mxu0
    %v816 = vadd.f32 0.0, %v815
    %v817 = vpop.f32.mrb[0].mxu0
    %v818 = vpop.f32.mrb[0].mxu0
    %v819 = vadd.f32 0.0, %v818
    %v820 = vpop.f32.mrb[0].mxu0
    %821 = vmatprep.mubr.bf16.mxu0 0
    %822 = vmatmul.mubr.bf16.gmra.mrb[0].mxu0 %v330
    %v823 = vpop.f32.mrb[0].mxu0
    %v824 = vadd.f32 0.0, %v823
    %v825 = vpop.f32.mrb[0].mxu0
    %v826 = vpop.f32.mrb[0].mxu0
    %v827 = vadd.f32 0.0, %v826
    %v828 = vpop.f32.mrb[0].mxu0
    %829 = vmatprep.mubr.bf16.mxu0 0
    %830 = vmatmul.mubr.bf16.gmra.mrb[0].mxu0 %v331
    %v831 = vpop.f32.mrb[0].mxu0
    %v832 = vadd.f32 0.0, %v831
    %v833 = vpop.f32.mrb[0].mxu0
    %v834 = vpop.f32.mrb[0].mxu0
    %v835 = vadd.f32 0.0, %v834
    %v836 = vpop.f32.mrb[0].mxu0
    %837 = vdwg.mxu0
    %v838 = vadd.f32 %v776, %v779
    %v839 = vadd.f32 %v838, %v784
    %v840 = vadd.f32 %v839, %v787
    %v841 = vadd.f32 %v840, %v792
    %v842 = vadd.f32 %v841, %v795
    %v843 = vadd.f32 %v842, %v800
    %v844 = vadd.f32 %v843, %v803
    %v845 = vadd.f32 %v844, %v808
    %v846 = vadd.f32 %v845, %v811
    %v847 = vadd.f32 %v846, %v816
    %v848 = vadd.f32 %v847, %v819
    %v849 = vadd.f32 %v848, %v824
    %v850 = vadd.f32 %v849, %v827
    %v851 = vadd.f32 %v850, %v832
    %v852 = vadd.f32 %v851, %v835
    %v853 = vrot.slane %v852, 4
    %v854 = vadd.f32 %v852, %v853
    %v855 = vrot.slane %v854, 2
    %v856 = vadd.f32 %v854, %v855
    %v857 = vrot.slane %v856, 1
    %v858 = vadd.f32 %v856, %v857
    %v859 = vmul.f32 %v858, %v458
    %v860 = vmul.f32 %v776, %v776
    %v861 = vmul.f32 %v779, %v779
    %v862 = vmul.f32 %v784, %v784
    %v863 = vmul.f32 %v787, %v787
    %v864 = vmul.f32 %v792, %v792
    %v865 = vmul.f32 %v795, %v795
    %v866 = vmul.f32 %v800, %v800
    %v867 = vmul.f32 %v803, %v803
    %v868 = vmul.f32 %v808, %v808
    %v869 = vmul.f32 %v811, %v811
    %v870 = vmul.f32 %v816, %v816
    %v871 = vmul.f32 %v819, %v819
    %v872 = vmul.f32 %v824, %v824
    %v873 = vmul.f32 %v827, %v827
    %v874 = vmul.f32 %v832, %v832
    %v875 = vmul.f32 %v835, %v835
    %v876 = vadd.f32 %v860, %v861
    %v877 = vadd.f32 %v876, %v862
    %v878 = vadd.f32 %v877, %v863
    %v879 = vadd.f32 %v878, %v864
    %v880 = vadd.f32 %v879, %v865
    %v881 = vadd.f32 %v880, %v866
    %v882 = vadd.f32 %v881, %v867
    %v883 = vadd.f32 %v882, %v868
    %v884 = vadd.f32 %v883, %v869
    %v885 = vadd.f32 %v884, %v870
    %v886 = vadd.f32 %v885, %v871
    %v887 = vadd.f32 %v886, %v872
    %v888 = vadd.f32 %v887, %v873
    %v889 = vadd.f32 %v888, %v874
    %v890 = vadd.f32 %v889, %v875
    %v891 = vrot.slane %v890, 4
    %v892 = vadd.f32 %v890, %v891
    %v893 = vrot.slane %v892, 2
    %v894 = vadd.f32 %v892, %v893
    %v895 = vrot.slane %v894, 1
    %v896 = vadd.f32 %v894, %v895
    %v897 = vmul.f32 %v896, %v458
    %v898 = vmul.f32 %v859, %v859
    %v899 = vsub.f32 %v897, %v898
    %v900 = vld [vmem:[%s3 + $0x1] sm:$0x1]
    %v901 = vadd.f32 %v899, 1e-05
    %v902 = vrsqrt.pop %v901
    %v903 = vmul.f32 %v900, %v902
    %v904 = vld [vmem:[%s4 + $0x1] sm:$0x1]
    %v905 = vmul.f32 %v859, %v903
    %v906 = vsub.f32 %v904, %v905
    %v907 = vlaneseq
    %v908 = vshrl.u32 %v907, 7
    %v909 = vsub.s32 0, %v908
    %v910 = vrot.slane %v903, %v909
    %v911 = vmul.f32 %v776, %v910
    %v912 = vmul.f32 %v779, %v910
    %v913 = vmul.f32 %v784, %v910
    %v914 = vmul.f32 %v787, %v910
    %v915 = vmul.f32 %v792, %v910
    %v916 = vmul.f32 %v795, %v910
    %v917 = vmul.f32 %v800, %v910
    %v918 = vmul.f32 %v803, %v910
    %v919 = vmul.f32 %v808, %v910
    %v920 = vmul.f32 %v811, %v910
    %v921 = vmul.f32 %v816, %v910
    %v922 = vmul.f32 %v819, %v910
    %v923 = vmul.f32 %v824, %v910
    %v924 = vmul.f32 %v827, %v910
    %v925 = vmul.f32 %v832, %v910
    %v926 = vmul.f32 %v835, %v910
    %v927 = vlaneseq
    %v928 = vshrl.u32 %v927, 7
    %v929 = vsub.s32 0, %v928
    %v930 = vrot.slane %v906, %v929
    %v931 = vadd.f32 %v911, %v930
    %v932 = vadd.f32 %v912, %v930
    %v933 = vadd.f32 %v913, %v930
    %v934 = vadd.f32 %v914, %v930
    %v935 = vadd.f32 %v915, %v930
    %v936 = vadd.f32 %v916, %v930
    %v937 = vadd.f32 %v917, %v930
    %v938 = vadd.f32 %v918, %v930
    %v939 = vadd.f32 %v919, %v930
    %v940 = vadd.f32 %v920, %v930
    %v941 = vadd.f32 %v921, %v930
    %v942 = vadd.f32 %v922, %v930
    %v943 = vadd.f32 %v923, %v930
    %v944 = vadd.f32 %v924, %v930
    %v945 = vadd.f32 %v925, %v930
    %v946 = vadd.f32 %v926, %v930
    %v947 = vmax.f32 %v931, 0.0
    %v948 = vmax.f32 %v932, 0.0
    %v949 = vmax.f32 %v933, 0.0
    %v950 = vmax.f32 %v934, 0.0
    %v951 = vmax.f32 %v935, 0.0
    %v952 = vmax.f32 %v936, 0.0
    %v953 = vmax.f32 %v937, 0.0
    %v954 = vmax.f32 %v938, 0.0
    %v955 = vmax.f32 %v939, 0.0
    %v956 = vmax.f32 %v940, 0.0
    %v957 = vmax.f32 %v941, 0.0
    %v958 = vmax.f32 %v942, 0.0
    %v959 = vmax.f32 %v943, 0.0
    %v960 = vmax.f32 %v944, 0.0
    %v961 = vmax.f32 %v945, 0.0
    %v962 = vmax.f32 %v946, 0.0
    %v963 = vmax.f32 %v947, %v948
    %v964 = vrot.slane %v963, 4
    %v965 = vmax.f32 %v963, %v964
    %v966 = vrot.slane %v965, 2
    %v967 = vmax.f32 %v965, %v966
    %v968 = vrot.slane %v967, 1
    %v969 = vmax.f32 %v967, %v968
    %v970 = vmax.f32 %v949, %v950
    %v971 = vrot.slane %v970, 4
    %v972 = vmax.f32 %v970, %v971
    %v973 = vrot.slane %v972, 2
    %v974 = vmax.f32 %v972, %v973
    %v975 = vrot.slane %v974, 1
    %v976 = vmax.f32 %v974, %v975
    %v977 = vmax.f32 %v951, %v952
    %v978 = vrot.slane %v977, 4
    %v979 = vmax.f32 %v977, %v978
    %v980 = vrot.slane %v979, 2
    %v981 = vmax.f32 %v979, %v980
    %v982 = vrot.slane %v981, 1
    %v983 = vmax.f32 %v981, %v982
    %v984 = vmax.f32 %v953, %v954
    %v985 = vrot.slane %v984, 4
    %v986 = vmax.f32 %v984, %v985
    %v987 = vrot.slane %v986, 2
    %v988 = vmax.f32 %v986, %v987
    %v989 = vrot.slane %v988, 1
    %v990 = vmax.f32 %v988, %v989
    %v991 = vmax.f32 %v955, %v956
    %v992 = vrot.slane %v991, 4
    %v993 = vmax.f32 %v991, %v992
    %v994 = vrot.slane %v993, 2
    %v995 = vmax.f32 %v993, %v994
    %v996 = vrot.slane %v995, 1
    %v997 = vmax.f32 %v995, %v996
    %v998 = vmax.f32 %v957, %v958
    %v999 = vrot.slane %v998, 4
    %v1000 = vmax.f32 %v998, %v999
    %v1001 = vrot.slane %v1000, 2
    %v1002 = vmax.f32 %v1000, %v1001
    %v1003 = vrot.slane %v1002, 1
    %v1004 = vmax.f32 %v1002, %v1003
    %v1005 = vmax.f32 %v959, %v960
    %v1006 = vrot.slane %v1005, 4
    %v1007 = vmax.f32 %v1005, %v1006
    %v1008 = vrot.slane %v1007, 2
    %v1009 = vmax.f32 %v1007, %v1008
    %v1010 = vrot.slane %v1009, 1
    %v1011 = vmax.f32 %v1009, %v1010
    %v1012 = vmax.f32 %v961, %v962
    %v1013 = vrot.slane %v1012, 4
    %v1014 = vmax.f32 %v1012, %v1013
    %v1015 = vrot.slane %v1014, 2
    %v1016 = vmax.f32 %v1014, %v1015
    %v1017 = vrot.slane %v1016, 1
    %v1018 = vmax.f32 %v1016, %v1017
    %v1019 = vpack.c.bf16 %v969, %v969
    %v1020 = vpack.c.bf16 %v976, %v976
    %v1021 = vpack.c.bf16 %v983, %v983
    %v1022 = vpack.c.bf16 %v990, %v990
    %v1023 = vpack.c.bf16 %v997, %v997
    %v1024 = vpack.c.bf16 %v1004, %v1004
    %v1025 = vpack.c.bf16 %v1011, %v1011
    %v1026 = vpack.c.bf16 %v1018, %v1018
    %v1027 = vld [vmem:[#allocation8] sm:$0xf]
    %v1028 = vld [vmem:[#allocation8 + $0x4] sm:$0xf]
    %v1029 = vld [vmem:[#allocation8 + $0x8] sm:$0xf]
    %v1030 = vld [vmem:[#allocation8 + $0xc] sm:$0xf]
    %v1031 = vld [vmem:[#allocation8 + $0x10] sm:$0xf]
    %v1032 = vld [vmem:[#allocation8 + $0x14] sm:$0xf]
    %v1033 = vld [vmem:[#allocation8 + $0x18] sm:$0xf]
    %v1034 = vld [vmem:[#allocation8 + $0x1c] sm:$0xf]
    %v1035 = vld [vmem:[#allocation8 + $0x20] sm:$0xf]
    %v1036 = vld [vmem:[#allocation8 + $0x24] sm:$0xf]
    %v1037 = vld [vmem:[#allocation8 + $0x28] sm:$0xf]
    %v1038 = vld [vmem:[#allocation8 + $0x2c] sm:$0xf]
    %v1039 = vld [vmem:[#allocation8 + $0x30] sm:$0xf]
    %v1040 = vld [vmem:[#allocation8 + $0x34] sm:$0xf]
    %v1041 = vld [vmem:[#allocation8 + $0x38] sm:$0xf]
    %v1042 = vld [vmem:[#allocation8 + $0x3c] sm:$0xf]
    %v1043 = vld [vmem:[%s6] sm:$0x1]
    %v1045 = vlaneseq
    %v1046 = vshrl.u32 %v1045, 7
    %v1047 = vsub.s32 0, %v1046
    %v1048 = vrot.slane %v1043, %v1047
    %v1058 = vunpack.c.l.b16 %v1019
    %v1059 = vunpack.c.l.b16 %v1020
    %v1060 = vunpack.c.l.b16 %v1021
    %v1061 = vunpack.c.l.b16 %v1022
    %v1062 = vunpack.c.l.b16 %v1023
    %v1063 = vunpack.c.l.b16 %v1024
    %v1064 = vunpack.c.l.b16 %v1025
    %v1065 = vunpack.c.l.b16 %v1026
    %vm1066 = vcmask 1041409
    %v1067 = vsel %vm1066, %v1059, %v1058
    %vm1068 = vcmask 1042434
    %v1069 = vsel %vm1068, %v1060, %v1067
    %vm1070 = vcmask 1043459
    %v1071 = vsel %vm1070, %v1061, %v1069
    %vm1072 = vcmask 1044484
    %v1073 = vsel %vm1072, %v1062, %v1071
    %vm1074 = vcmask 1045509
    %v1075 = vsel %vm1074, %v1063, %v1073
    %vm1076 = vcmask 1046534
    %v1077 = vsel %vm1076, %v1064, %v1075
    %vm1078 = vcmask 1047559
    %v1079 = vsel %vm1078, %v1065, %v1077
    %v1080 = vpack.c.b16 %v1079, %v1079
    %v1098 = vunpack.c.l.b16 %v1027
    %v1099 = vunpack.c.l.b16 %v1028
    %v1100 = vunpack.c.l.b16 %v1029
    %v1101 = vunpack.c.l.b16 %v1030
    %v1102 = vunpack.c.l.b16 %v1031
    %v1103 = vunpack.c.l.b16 %v1032
    %v1104 = vunpack.c.l.b16 %v1033
    %v1105 = vunpack.c.l.b16 %v1034
    %v1106 = vunpack.c.l.b16 %v1035
    %v1107 = vunpack.c.l.b16 %v1036
    %v1108 = vunpack.c.l.b16 %v1037
    %v1109 = vunpack.c.l.b16 %v1038
    %v1110 = vunpack.c.l.b16 %v1039
    %v1111 = vunpack.c.l.b16 %v1040
    %v1112 = vunpack.c.l.b16 %v1041
    %v1113 = vunpack.c.l.b16 %v1042
    %v1114 = vpack.c.b16 %v1099, %v1098
    %v1115 = vpack.c.b16 %v1101, %v1100
    %v1116 = vpack.c.b16 %v1103, %v1102
    %v1117 = vpack.c.b16 %v1105, %v1104
    %v1118 = vpack.c.b16 %v1107, %v1106
    %v1119 = vpack.c.b16 %v1109, %v1108
    %v1120 = vpack.c.b16 %v1111, %v1110
    %v1121 = vpack.c.b16 %v1113, %v1112
    %1130 = vmatprep.subr.bf16.mxu0 0
    %1131 = vmatpush1.bf16.msra.mxu0 %v1114
    %1132 = vmatprep.subr.bf16.mxu0 0
    %1133 = vmatpush1.bf16.msra.mxu0 %v1115
    %1134 = vmatprep.subr.bf16.mxu0 0
    %1135 = vmatpush1.bf16.msra.mxu0 %v1116
    %1136 = vmatprep.subr.bf16.mxu0 0
    %1137 = vmatpush1.bf16.msra.mxu0 %v1117
    %1138 = vmatprep.subr.bf16.mxu0 0
    %1139 = vmatpush1.bf16.msra.mxu0 %v1118
    %1140 = vmatprep.subr.bf16.mxu0 0
    %1141 = vmatpush1.bf16.msra.mxu0 %v1119
    %1142 = vmatprep.subr.bf16.mxu0 0
    %1143 = vmatpush1.bf16.msra.mxu0 %v1120
    %1144 = vmatprep.subr.bf16.mxu0 0
    %1145 = vmatpush1.bf16.msra.mxu0 %v1121
    %1146 = vmatprep.subr.bf16.mxu0 0
    %1147 = vmatpush1.bf16.msra.mxu0 0
    %1148 = vmatprep.subr.bf16.mxu0 0
    %1149 = vmatpush1.bf16.msra.mxu0 0
    %1150 = vmatprep.subr.bf16.mxu0 0
    %1151 = vmatpush1.bf16.msra.mxu0 0
    %1152 = vmatprep.subr.bf16.mxu0 0
    %1153 = vmatpush1.bf16.msra.mxu0 0
    %1154 = vmatprep.subr.bf16.mxu0 0
    %1155 = vmatpush1.bf16.msra.mxu0 0
    %1156 = vmatprep.subr.bf16.mxu0 0
    %1157 = vmatpush1.bf16.msra.mxu0 0
    %1158 = vmatprep.subr.bf16.mxu0 0
    %1159 = vmatpush1.bf16.msra.mxu0 0
    %1160 = vmatprep.subr.bf16.mxu0 0
    %1161 = vmatpush1.bf16.msra.mxu0 0
    %1162 = vmatprep.mubr.bf16.mxu0 0
    %1163 = vmatmul.mubr.bf16.gmra.mrb[0].mxu0 %v1080
    %v1164 = vpop.f32.mrb[0].mxu0
    %v1165 = vadd.f32 %v1048, %v1164
    %v1166 = vpop.f32.mrb[0].mxu0
    %v1167 = vpop.f32.mrb[0].mxu0
    %v1168 = vpop.f32.mrb[0].mxu0
    %1169 = vdwg.mxu0
    %1170 = vst [vmem:[#allocation10] sm:$0xff] %v1165
    // Predicated region
    $region46: #{gcnnet_fused_forward.1} parent=1 // pred_check
      _
    $region47: #{gcnnet_fused_forward.1} parent=1 // pred_check_branch
      %1172 = sbr.rel (0) target = $region49
    $region48: #{gcnnet_fused_forward.1} parent=1 // pred_region
      %s1174 = ssub.s32 128, 128
      %1175 = vsyncadd [#allocation4], %s1174
      %s1177 = sshll.u32 [#allocation10], 4
      %s1178 = int_to_ptr.vmem [resolvable:$true] %s1177
      %1180 = dma.vmem_to_hbm [thread:$0]  %s1178, 128, %s7, [#allocation4]
    $region49: #{gcnnet_fused_forward.1} parent=1 // pred_fallthru
      _
    // Predicated region
    $region50: #{gcnnet_fused_forward.1} parent=1 // pred_check
      _
    $region51: #{gcnnet_fused_forward.1} parent=1 // pred_check_branch
      %1182 = sbr.rel (0) target = $region53
    $region52: #{gcnnet_fused_forward.1} parent=1 // pred_region
      %1183 = dma.done [#allocation4], 128
    $region53: #{gcnnet_fused_forward.1} parent=1 // pred_fallthru
      _
    %1184 = vsyncpa [#allocation3], 1
    %1185 = vsyncpa [#allocation6], 1
    %1186 = vsyncpa [#allocation9], 1
    %1187 = vsyncpa [#allocation4], 1

</llo_original>
